<compile_context>
chip_gen: v6e
topology: v6e:2x2x1
jax: 0.10.0
libtpu: 0.0.40
codegen_flags: <defaults>
</compile_context>

<pallas_src>
import functools

import jax
import jax.numpy as jnp
from jax.experimental import pallas as pl
from jax.experimental.pallas import tpu as pltpu


# ----------------------------- small helpers ------------------------------

def _token_tile(n, target=512):
    """Token-axis tile: largest multiple of 8 <= target that divides n; if none
    divides, return `target` and let the pl.cdiv grid pad the last block (never
    silently requests a single full-size block)."""
    if n <= target:
        return n
    for t in range(target, 7, -8):
        if n % t == 0:
            return t
    return target


_VMEM_CAP_BYTES = None


def _vmem_cap_bytes():
    """Physical VMEM capacity (fallback: 64 MiB, the v7x per-core size)."""
    global _VMEM_CAP_BYTES
    if _VMEM_CAP_BYTES is None:
        cap = 64 << 20
        try:
            cap = int(pltpu.get_tpu_info().vmem_capacity_bytes)
        except Exception:
            pass
        _VMEM_CAP_BYTES = cap
    return _VMEM_CAP_BYTES


_WEIGHT_BUFFERS = None


def _weight_buffer_count():
    """1 if constant-index weight blocks can be single-buffered via
    pipeline_mode=pl.Buffered(1) on this runtime, else 2 (default)."""
    global _WEIGHT_BUFFERS
    if _WEIGHT_BUFFERS is not None:
        return _WEIGHT_BUFFERS
    count = 2
    if hasattr(pl, "Buffered"):
        try:
            def _probe(x_ref, w_ref, o_ref):
                o_ref[...] = x_ref[...] + w_ref[...]

            w_spec = pl.BlockSpec((8, 128), lambda i: (0, 0),
                                  pipeline_mode=pl.Buffered(1))
            f = pl.pallas_call(
                _probe,
                out_shape=jax.ShapeDtypeStruct((16, 128), jnp.float32),
                grid=(2,),
                in_specs=[pl.BlockSpec((8, 128), lambda i: (i, 0)), w_spec],
                out_specs=pl.BlockSpec((8, 128), lambda i: (i, 0)),
            )
            jax.block_until_ready(f(jnp.zeros((16, 128), jnp.float32),
                                    jnp.zeros((8, 128), jnp.float32)))
            count = 1
        except Exception:
            count = 2
    _WEIGHT_BUFFERS = count
    return count


def _weight_spec(shape):
    """BlockSpec for a block that stays resident across all grid steps (constant
    index map); single-buffered when supported to halve its VMEM footprint."""
    ndim = len(shape)
    index_map = lambda *args: (0,) * ndim
    if _weight_buffer_count() == 1:
        return pl.BlockSpec(shape, index_map, pipeline_mode=pl.Buffered(1))
    return pl.BlockSpec(shape, index_map)


def _mosaic_params(*, weight_bytes=0, stream_bytes=0, scratch_bytes=0, semantics=None):
    """CompilerParams with an explicit VMEM budget: resident weights (x1 or x2
    depending on buffering) + double-buffered streamed tiles + kernel scratch."""
    need = (_weight_buffer_count() * weight_bytes + 2 * stream_bytes
            + scratch_bytes + (2 << 20))
    limit = int(max(32 << 20, min(need, _vmem_cap_bytes() - (4 << 20))))
    kwargs = {"vmem_limit_bytes": limit}
    if semantics is not None:
        kwargs["dimension_semantics"] = semantics
    return pltpu.CompilerParams(**kwargs)


def _nbytes(a):
    return int(a.size) * a.dtype.itemsize


# ----------------------------- Pallas kernels -----------------------------

def _attention_kernel(x_ref, w_ref, b_ref, bias_ref, o_ref, *,
                      n_heads, head_dim, scale):
    """Fused QKV projection + multi-head self-attention for one batch element."""
    H = n_heads * head_dim
    x = x_ref[...]                                            # (S, H) bf16
    qkv = (jnp.dot(x, w_ref[...], preferred_element_type=jnp.float32)
           + b_ref[...]).astype(jnp.bfloat16)                 # (S, 3H)
    bias = bias_ref[0]                                        # (1, S) f32 mask bias
    for h in range(n_heads):                                  # static unroll over heads
        q = qkv[:, h * head_dim:(h + 1) * head_dim]
        k = qkv[:, H + h * head_dim:H + (h + 1) * head_dim]
        v = qkv[:, 2 * H + h * head_dim:2 * H + (h + 1) * head_dim]
        s = jax.lax.dot_general(q, k, (((1,), (1,)), ((), ())),
                                preferred_element_type=jnp.float32) * scale
        s = s + bias                                          # f32 scores; -1e9 is safe
        m = jnp.max(s, axis=-1, keepdims=True)
        p = jnp.exp(s - m)                                    # f32 exp (v5e-safe)
        denom = jnp.sum(p, axis=-1, keepdims=True)
        p = (p * pl.reciprocal(denom, approx=True)).astype(jnp.bfloat16)
        ctx_h = jnp.dot(p, v, preferred_element_type=jnp.float32)
        # store each head's result directly into its lane slice (no concat)
        o_ref[:, h * head_dim:(h + 1) * head_dim] = ctx_h.astype(o_ref.dtype)
    # TODO(synk): long-seq v7x: add a query-tile grid axis (grid=(B, S//tq)) to use the
    #             second TensorCore and bound the (tq,S) score tile.
    # TODO(synk): real RoBERTa head_dim=64 underfills the 256-wide v6e/v7x MXU; pack
    #             2-4 heads per contraction there (demo head_dim=128 is fine).
    # TODO(synk): on v6e/v7x a bf16 exp (arg built in f32) would double EUP throughput
    #             at long S; kept f32 everywhere for v5e safety.


def attention(x, wqkv, bqkv, bias, batch, seq, n_heads, head_dim):
    # x: (B*S, H) bf16; wqkv: (H, 3H) bf16; bqkv: (1, 3H) f32; bias: (B, 1, S) f32
    H = n_heads * head_dim
    scale = 1.0 / float(head_dim) ** 0.5
    stream = seq * H * 2 * 2 + seq * 4                    # x tile + out tile + bias row
    scratch = seq * 3 * H * (4 + 2) + 2 * seq * seq * 4   # qkv f32+bf16, score tiles
    return pl.pallas_call(
        functools.partial(_attention_kernel, n_heads=n_heads, head_dim=head_dim,
                          scale=scale),
        out_shape=jax.ShapeDtypeStruct((batch * seq, H), jnp.bfloat16),
        grid=(batch,),
        in_specs=[
            pl.BlockSpec((seq, H), lambda b: (b, 0)),
            _weight_spec((H, 3 * H)),                     # resident across batches
            _weight_spec((1, 3 * H)),
            pl.BlockSpec((1, 1, seq), lambda b: (b, 0, 0)),
        ],
        out_specs=pl.BlockSpec((seq, H), lambda b: (b, 0)),
        compiler_params=_mosaic_params(
            weight_bytes=_nbytes(wqkv) + _nbytes(bqkv),
            stream_bytes=stream, scratch_bytes=scratch,
            semantics=("parallel",)),
    )(x, wqkv, bqkv, bias)


def _proj_residual_ln_kernel(ctx_ref, res_ref, w_ref, b_ref, g_ref, beta_ref,
                             o_ref, *, eps):
    y = jnp.dot(ctx_ref[...], w_ref[...], preferred_element_type=jnp.float32)
    y = y + b_ref[...] + res_ref[...].astype(jnp.float32)     # residual add in f32
    mean = jnp.mean(y, axis=-1, keepdims=True)
    var = jnp.mean((y - mean) ** 2, axis=-1, keepdims=True)
    inv = jax.lax.rsqrt(var + eps)
    o_ref[...] = ((y - mean) * inv * g_ref[...] + beta_ref[...]).astype(o_ref.dtype)


def proj_residual_layernorm(ctx, residual, w, b, g, beta, eps=1e-5, tile_target=512):
    # ctx: (N, Din) bf16, residual: (N, H) bf16 -> (N, H) bf16
    N, H = residual.shape
    Din = ctx.shape[1]
    tm = _token_tile(N, tile_target)
    w_bytes = _nbytes(w) + _nbytes(b) + _nbytes(g) + _nbytes(beta)
    stream = tm * (Din + 2 * H) * 2
    return pl.pallas_call(
        functools.partial(_proj_residual_ln_kernel, eps=eps),
        out_shape=jax.ShapeDtypeStruct((N, H), jnp.bfloat16),
        grid=(pl.cdiv(N, tm),),
        in_specs=[
            pl.BlockSpec((tm, Din), lambda i: (i, 0)),
            pl.BlockSpec((tm, H), lambda i: (i, 0)),
            _weight_spec((Din, H)),
            _weight_spec((1, H)),
            _weight_spec((1, H)),
            _weight_spec((1, H)),
        ],
        out_specs=pl.BlockSpec((tm, H), lambda i: (i, 0)),
        compiler_params=_mosaic_params(weight_bytes=w_bytes, stream_bytes=stream,
                                       scratch_bytes=tm * H * 4,
                                       semantics=("parallel",)),
    )(ctx, residual, w, b, g, beta)


def _ffn_kernel(x_ref, wi_ref, bi_ref, wo_ref, bo_ref, g_ref, beta_ref, o_ref, *, eps):
    x = x_ref[...]                                            # (tm, H) bf16 residual
    h = jnp.dot(x, wi_ref[...], preferred_element_type=jnp.float32) + bi_ref[...]
    # TODO(synk): HF RoBERTa uses exact erf GELU; tanh approximation kept for robust
    #             Mosaic lowering (small numeric drift).
    h = jax.nn.gelu(h, approximate=True)
    y = jnp.dot(h.astype(jnp.bfloat16), wo_ref[...],
                preferred_element_type=jnp.float32) + bo_ref[...]
    y = y + x.astype(jnp.float32)                             # residual add in f32
    mean = jnp.mean(y, axis=-1, keepdims=True)
    var = jnp.mean((y - mean) ** 2, axis=-1, keepdims=True)
    inv = jax.lax.rsqrt(var + eps)
    o_ref[...] = ((y - mean) * inv * g_ref[...] + beta_ref[...]).astype(o_ref.dtype)


def ffn_residual_layernorm(x, wi, bi, wo, bo, g, beta, eps=1e-5, tile_target=512):
    # Fused: gelu(x@Wi+bi) @ Wo + bo + x, layernorm. Intermediate never hits HBM.
    N, H = x.shape
    I = wi.shape[1]
    tm = _token_tile(N, tile_target)
    w_bytes = _nbytes(wi) + _nbytes(wo) + _nbytes(bi) + _nbytes(bo) + _nbytes(g) + _nbytes(beta)
    stream = tm * 2 * H * 2
    scratch = tm * I * (4 + 2) + tm * H * 4
    return pl.pallas_call(
        functools.partial(_ffn_kernel, eps=eps),
        out_shape=jax.ShapeDtypeStruct((N, H), jnp.bfloat16),
        grid=(pl.cdiv(N, tm),),
        in_specs=[
            pl.BlockSpec((tm, H), lambda i: (i, 0)),
            _weight_spec((H, I)),
            _weight_spec((1, I)),
            _weight_spec((I, H)),
            _weight_spec((1, H)),
            _weight_spec((1, H)),
            _weight_spec((1, H)),
        ],
        out_specs=pl.BlockSpec((tm, H), lambda i: (i, 0)),
        compiler_params=_mosaic_params(weight_bytes=w_bytes, stream_bytes=stream,
                                       scratch_bytes=scratch,
                                       semantics=("parallel",)),
    )(x, wi, bi, wo, bo, g, beta)


def _layernorm_kernel(x_ref, g_ref, b_ref, o_ref, *, eps):
    x = x_ref[...].astype(jnp.float32)
    mean = jnp.mean(x, axis=-1, keepdims=True)
    var = jnp.mean((x - mean) ** 2, axis=-1, keepdims=True)
    inv = jax.lax.rsqrt(var + eps)
    o_ref[...] = ((x - mean) * inv * g_ref[...] + b_ref[...]).astype(o_ref.dtype)


def layernorm(x, g, b, eps=1e-5, tile_target=512):
    # embedding layernorm: (N, H) f32 -> (N, H) bf16 residual stream
    # TODO(synk): could be folded into the first layer's attention input path to save
    #             one (N,H) HBM read; runs once per forward so kept standalone.
    N, H = x.shape
    tm = _token_tile(N, tile_target)
    return pl.pallas_call(
        functools.partial(_layernorm_kernel, eps=eps),
        out_shape=jax.ShapeDtypeStruct((N, H), jnp.bfloat16),
        grid=(pl.cdiv(N, tm),),
        in_specs=[
            pl.BlockSpec((tm, H), lambda i: (i, 0)),
            _weight_spec((1, H)),
            _weight_spec((1, H)),
        ],
        out_specs=pl.BlockSpec((tm, H), lambda i: (i, 0)),
        compiler_params=_mosaic_params(stream_bytes=tm * H * (4 + 2),
                                       semantics=("parallel",)),
    )(x, g, b)


def _head_kernel(cls_ref, pw_ref, pb_ref, w1_ref, b1_ref, w2_ref, b2_ref,
                 w3_ref, b3_ref, o_ref):
    # pooler: tanh(CLS @ W_pool + b); dropout layers are identity at inference
    pooled = jnp.tanh(
        jnp.dot(cls_ref[...].astype(jnp.bfloat16), pw_ref[...],
                preferred_element_type=jnp.float32) + pb_ref[...])
    h = jnp.dot(pooled.astype(jnp.bfloat16), w1_ref[...],
                preferred_element_type=jnp.float32) + b1_ref[...]
    h = jnp.maximum(h, 0.0)
    h = jnp.dot(h.astype(jnp.bfloat16), w2_ref[...],
                preferred_element_type=jnp.float32) + b2_ref[...]
    h = jnp.maximum(h, 0.0)
    y = jnp.dot(h.astype(jnp.bfloat16), w3_ref[...],
                preferred_element_type=jnp.float32) + b3_ref[...]
    o_ref[...] = y.astype(o_ref.dtype)


def pooler_and_head(cls_tok, pw, pb, w1, b1, w2, b2, w3, b3):
    # Fused pooler + Linear(H,512)+ReLU + Linear(512,128)+ReLU + Linear(128,1)
    B, H = cls_tok.shape
    w_bytes = sum(_nbytes(a) for a in (pw, pb, w1, b1, w2, b2, w3, b3))
    return pl.pallas_call(
        _head_kernel,
        out_shape=jax.ShapeDtypeStruct((B, 1), jnp.float32),
        grid=(1,),
        in_specs=[
            pl.BlockSpec((B, H), lambda i: (0, 0)),
            _weight_spec((H, H)),
            _weight_spec((1, H)),
            _weight_spec((H, 512)),
            _weight_spec((1, 512)),
            _weight_spec((512, 128)),
            _weight_spec((1, 128)),
            _weight_spec((128, 1)),
            _weight_spec((1, 1)),
        ],
        out_specs=pl.BlockSpec((B, 1), lambda i: (0, 0)),
        compiler_params=_mosaic_params(
            weight_bytes=w_bytes,
            stream_bytes=B * (H + 512 + 128 + 1) * 4),
    )(cls_tok, pw, pb, w1, b1, w2, b2, w3, b3)


# --------------------------- Parameter creation ---------------------------

def init_params(key, cfg):
    H, I = cfg["hidden"], cfg["intermediate"]
    keys = iter(jax.random.split(key, 256))

    def w(shape, scale=0.02):
        return (scale * jax.random.normal(next(keys), shape, dtype=jnp.float32)
                ).astype(jnp.bfloat16)

    def f32(shape, scale=0.02):
        return scale * jax.random.normal(next(keys), shape, dtype=jnp.float32)

    def zeros(shape):
        return jnp.zeros(shape, jnp.float32)

    p = {
        "word_emb": f32((cfg["vocab"], H)),
        "pos_emb": f32((cfg["max_pos"], H)),
        "tok_emb": f32((2, H)),
        "emb_ln_g": jnp.ones((1, H), jnp.float32),
        "emb_ln_b": zeros((1, H)),
        "pool_w": w((H, H)), "pool_b": zeros((1, H)),
        # downstream head: Linear(H,512) -> Linear(512,128) -> Linear(128,1)
        "d_w1": w((H, 512)), "d_b1": zeros((1, 512)),
        "d_w2": w((512, 128)), "d_b2": zeros((1, 128)),
        "d_w3": w((128, 1)), "d_b3": zeros((1, 1)),
        "layers": [],
    }
    for _ in range(cfg["layers"]):
        lp = {
            "wqkv": w((H, 3 * H)), "bqkv": zeros((1, 3 * H)),   # fused Q/K/V projection
            "wo": w((H, H)), "bo": zeros((1, H)),
            "ln1_g": jnp.ones((1, H), jnp.float32), "ln1_b": zeros((1, H)),
            "wi": w((H, I)), "bi": zeros((1, I)),
            "wo2": w((I, H)), "bo2": zeros((1, H)),
            "ln2_g": jnp.ones((1, H), jnp.float32), "ln2_b": zeros((1, H)),
        }
        p["layers"].append(lp)
    return p


# ------------------------------ Forward pass ------------------------------

def roberta_for_regression_forward(params, input_ids, attention_mask, cfg):
    B, S = input_ids.shape
    H, nH = cfg["hidden"], cfg["heads"]
    Dh = H // nH
    pad_id = cfg["pad_id"]

    # --- embeddings (table gathers stay in plain JAX glue) ---
    valid = (input_ids != pad_id).astype(jnp.int32)
    position_ids = jnp.cumsum(valid, axis=1) * valid + pad_id   # RoBERTa position ids
    emb = (jnp.take(params["word_emb"], input_ids, axis=0)
           + jnp.take(params["pos_emb"], position_ids, axis=0)
           + params["tok_emb"][0][None, None, :])
    x = emb.reshape(B * S, H).astype(jnp.float32)
    # residual stream kept in bf16 from here on (LN stats / adds stay f32 in-kernel)
    x = layernorm(x, params["emb_ln_g"], params["emb_ln_b"])    # (B*S, H) bf16
    # embedding dropout is identity at inference

    # additive attention-mask bias, kept f32 (scores are computed in f32 in-kernel)
    bias = ((1.0 - attention_mask.astype(jnp.float32)) * -1e9).reshape(B, 1, S)

    for lp in params["layers"]:
        ctx = attention(x, lp["wqkv"], lp["bqkv"], bias, B, S, nH, Dh)   # (B*S, H) bf16
        x = proj_residual_layernorm(ctx, x, lp["wo"], lp["bo"],
                                    lp["ln1_g"], lp["ln1_b"])            # (B*S, H) bf16
        x = ffn_residual_layernorm(x, lp["wi"], lp["bi"], lp["wo2"], lp["bo2"],
                                   lp["ln2_g"], lp["ln2_b"])             # (B*S, H) bf16

    # pooler operates on the CLS token (position 0 of each sequence)
    cls_tok = x.reshape(B, S, H)[:, 0, :]                                # (B, H) bf16
    out = pooler_and_head(cls_tok, params["pool_w"], params["pool_b"],
                          params["d_w1"], params["d_b1"],
                          params["d_w2"], params["d_b2"],
                          params["d_w3"], params["d_b3"])                # (B, 1) f32
    return out


# ---------------------------------- main -----------------------------------

if __name__ == "__main__":
    # head_dim = hidden/heads = 128 keeps the in-kernel head slices lane-aligned.
    cfg = dict(vocab=64, hidden=256, heads=2, layers=2, intermediate=1024,
               max_pos=64, pad_id=1)
    B, S = 2, 16

    key = jax.random.PRNGKey(0)
    k_params, k_ids = jax.random.split(key)
    params = init_params(k_params, cfg)

    input_ids = jax.random.randint(k_ids, (B, S), 3, cfg["vocab"], dtype=jnp.int32)
    attention_mask = jnp.ones((B, S), dtype=jnp.int32)
    # pad the tail of the second sequence to exercise masking
    input_ids = input_ids.at[1, 12:].set(cfg["pad_id"])
    attention_mask = attention_mask.at[1, 12:].set(0)

    out = roberta_for_regression_forward(params, input_ids, attention_mask, cfg)
    out = jax.block_until_ready(out)
    assert out.shape == (B, 1) and out.dtype == jnp.float32
    assert bool(jnp.all(jnp.isfinite(out)))
    print("KERNEL_OK")
</pallas_src>

<mosaic_0001>
module attributes {stable_mosaic.version = 11 : i64} {
  func.func @_probe(%arg0: i32, %arg1: memref<8x128xf32, #tpu.memory_space<vmem>>, %arg2: memref<8x128xf32, #tpu.memory_space<vmem>>, %arg3: memref<8x128xf32, #tpu.memory_space<vmem>>) attributes {dimension_semantics = [#tpu.dimension_semantics<arbitrary>], iteration_bounds = array<i64: 2>, scalar_prefetch = 0 : i64, scratch_operands = 0 : i64, tpu.core_type = #tpu.core_type<tc>, window_params = [{transform_indices = @transform_0, window_bounds = array<i64: 8, 128>}, {pipeline_mode = #tpu.pipeline_mode<synchronous>, transform_indices = @transform_1, window_bounds = array<i64: 8, 128>}, {transform_indices = @transform_2, window_bounds = array<i64: 8, 128>}]} {
    %c0 = arith.constant 0 : index
    %c0_0 = arith.constant 0 : index
    %0 = vector.load %arg1[%c0, %c0_0] : memref<8x128xf32, #tpu.memory_space<vmem>>, vector<8x128xf32>
    %c0_1 = arith.constant 0 : index
    %c0_2 = arith.constant 0 : index
    %1 = vector.load %arg2[%c0_1, %c0_2] : memref<8x128xf32, #tpu.memory_space<vmem>>, vector<8x128xf32>
    %2 = arith.addf %0, %1 : vector<8x128xf32>
    %c0_3 = arith.constant 0 : index
    %c0_4 = arith.constant 0 : index
    %3 = vector.load %arg3[%c0_3, %c0_4] : memref<8x128xf32, #tpu.memory_space<vmem>>, vector<8x128xf32>
    tpu.vector_store %arg3[%c0_3, %c0_4], %2 {strides = array<i32>} : memref<8x128xf32, #tpu.memory_space<vmem>>, vector<8x128xf32>,
    return
  }
  func.func @transform_0(%arg0: i32) -> (i32, i32) {
    %c0_i32 = arith.constant 0 : i32
    %c0_i32_0 = arith.constant 0 : i32
    return %arg0, %c0_i32 : i32, i32
  }
  func.func @transform_1(%arg0: i32) -> (i32, i32) {
    %c0_i32 = arith.constant 0 : i32
    %c0_i32_0 = arith.constant 0 : i32
    %c0_i32_1 = arith.constant 0 : i32
    return %c0_i32, %c0_i32_0 : i32, i32
  }
  func.func @transform_2(%arg0: i32) -> (i32, i32) {
    %c0_i32 = arith.constant 0 : i32
    %c0_i32_0 = arith.constant 0 : i32
    return %arg0, %c0_i32 : i32, i32
  }
}

module attributes {stable_mosaic.version = 11 : i64} {
  func.func @_layernorm_kernel(%arg0: i32, %arg1: memref<32x256xf32, #tpu.memory_space<vmem>>, %arg2: memref<1x256xf32, #tpu.memory_space<vmem>>, %arg3: memref<1x256xf32, #tpu.memory_space<vmem>>, %arg4: memref<32x256xbf16, #tpu.memory_space<vmem>>) attributes {dimension_semantics = [#tpu.dimension_semantics<parallel>], iteration_bounds = array<i64: 1>, scalar_prefetch = 0 : i64, scratch_operands = 0 : i64, tpu.core_type = #tpu.core_type<tc>, window_params = [{transform_indices = @transform_0, window_bounds = array<i64: 32, 256>}, {pipeline_mode = #tpu.pipeline_mode<synchronous>, transform_indices = @transform_1, window_bounds = array<i64: 1, 256>}, {pipeline_mode = #tpu.pipeline_mode<synchronous>, transform_indices = @transform_2, window_bounds = array<i64: 1, 256>}, {transform_indices = @transform_3, window_bounds = array<i64: 32, 256>}]} {
    %c0 = arith.constant 0 : index
    %c0_0 = arith.constant 0 : index
    %0 = vector.load %arg1[%c0, %c0_0] : memref<32x256xf32, #tpu.memory_space<vmem>>, vector<32x256xf32>
    %cst = arith.constant dense<0.000000e+00> : vector<32xf32>
    %1 = vector.multi_reduction <add>, %0, %cst [1] : vector<32x256xf32> to vector<32xf32>
    %2 = vector.shape_cast %1 : vector<32xf32> to vector<32x1xf32>
    %cst_1 = arith.constant 2.560000e+02 : f32
    %3 = vector.broadcast %cst_1 : f32 to vector<32x1xf32>
    %4 = arith.divf %2, %3 : vector<32x1xf32>
    %5 = vector.broadcast %4 : vector<32x1xf32> to vector<32x256xf32>
    %6 = arith.subf %0, %5 : vector<32x256xf32>
    %7 = arith.mulf %6, %6 : vector<32x256xf32>
    %cst_2 = arith.constant dense<0.000000e+00> : vector<32xf32>
    %8 = vector.multi_reduction <add>, %7, %cst_2 [1] : vector<32x256xf32> to vector<32xf32>
    %9 = vector.shape_cast %8 : vector<32xf32> to vector<32x1xf32>
    %cst_3 = arith.constant 2.560000e+02 : f32
    %10 = vector.broadcast %cst_3 : f32 to vector<32x1xf32>
    %11 = arith.divf %9, %10 : vector<32x1xf32>
    %cst_4 = arith.constant 9.99999974E-6 : f32
    %12 = vector.broadcast %cst_4 : f32 to vector<32x1xf32>
    %13 = arith.addf %11, %12 : vector<32x1xf32>
    %14 = math.rsqrt %13 : vector<32x1xf32>
    %15 = vector.broadcast %4 : vector<32x1xf32> to vector<32x256xf32>
    %16 = arith.subf %0, %15 : vector<32x256xf32>
    %17 = vector.broadcast %14 : vector<32x1xf32> to vector<32x256xf32>
    %18 = arith.mulf %16, %17 : vector<32x256xf32>
    %c0_5 = arith.constant 0 : index
    %c0_6 = arith.constant 0 : index
    %19 = vector.load %arg2[%c0_5, %c0_6] : memref<1x256xf32, #tpu.memory_space<vmem>>, vector<1x256xf32>
    %20 = vector.broadcast %19 : vector<1x256xf32> to vector<32x256xf32>
    %21 = arith.mulf %18, %20 : vector<32x256xf32>
    %c0_7 = arith.constant 0 : index
    %c0_8 = arith.constant 0 : index
    %22 = vector.load %arg3[%c0_7, %c0_8] : memref<1x256xf32, #tpu.memory_space<vmem>>, vector<1x256xf32>
    %23 = vector.broadcast %22 : vector<1x256xf32> to vector<32x256xf32>
    %24 = arith.addf %21, %23 : vector<32x256xf32>
    %25 = arith.truncf %24 : vector<32x256xf32> to vector<32x256xbf16>
    %c0_9 = arith.constant 0 : index
    %c0_10 = arith.constant 0 : index
    %26 = vector.load %arg4[%c0_9, %c0_10] : memref<32x256xbf16, #tpu.memory_space<vmem>>, vector<32x256xbf16>
    tpu.vector_store %arg4[%c0_9, %c0_10], %25 {strides = array<i32>} : memref<32x256xbf16, #tpu.memory_space<vmem>>, vector<32x256xbf16>,
    return
  }
  func.func @transform_0(%arg0: i32) -> (i32, i32) {
    %c0_i32 = arith.constant 0 : i32
    %c0_i32_0 = arith.constant 0 : i32
    return %arg0, %c0_i32 : i32, i32
  }
  func.func @transform_1(%arg0: i32) -> (i32, i32) {
    %c0_i32 = arith.constant 0 : i32
    %c0_i32_0 = arith.constant 0 : i32
    %c0_i32_1 = arith.constant 0 : i32
    return %c0_i32, %c0_i32_0 : i32, i32
  }
  func.func @transform_2(%arg0: i32) -> (i32, i32) {
    %c0_i32 = arith.constant 0 : i32
    %c0_i32_0 = arith.constant 0 : i32
    %c0_i32_1 = arith.constant 0 : i32
    return %c0_i32, %c0_i32_0 : i32, i32
  }
  func.func @transform_3(%arg0: i32) -> (i32, i32) {
    %c0_i32 = arith.constant 0 : i32
    %c0_i32_0 = arith.constant 0 : i32
    return %arg0, %c0_i32 : i32, i32
  }
}

</mosaic_0001>

<llo_original>
// kernel: tpu_custom_call.1
$region0: #{tpu_custom_call.1}
  #allocation0 [shape = 'u32[]', space=smem, size = 0x4, offset = 0x4, fixed_abs, tag = 'smem constant byte address 0x4 - core index']
  #allocation1 [shape = 'u32[144,128]{1,0:T(1,128)}', space=vmem, size = 0x12000, scoped, tag = 'internal scratch']
  %s0 = inlined_call_operand.hbm [shape: f32[16,128], index: 0, kind: input, shape index: {}]
  %s1 = inlined_call_operand.hbm [shape: f32[8,128], index: 1, kind: input, shape index: {}]
  %s2 = inlined_call_operand.hbm [shape: f32[16,128], index: 2, kind: output, shape index: {}]
  %s3 = sld [smem:[#allocation0]]
  $region49: #{tpu_custom_call.1} parent=0
    _
  %s5 = ssub.s32 1, %s3
  %s6 = scalar_select 0, %s5, %s3
  $region1: #{tpu_custom_call.1} parent=0
    #allocation2 [shape = 'u8[8192]{0}', space=vmem, size = 0x2000, scoped, tag = 'input window, operand 0']
    #allocation3 [shape = 's32[2]{0}', space=sflag, size = 0x8, scoped, tag = 'scoped memory for tpu_custom_call.1']
    #allocation4 [shape = 's32[2]{0}', space=sflag, size = 0x8, scoped, tag = 'scoped memory for tpu_custom_call.1']
    #allocation5 [shape = 'u8[4096]{0}', space=vmem, size = 0x1000, scoped, tag = 'input window, operand 1, single buffered']
    #allocation6 [shape = 's32[1]{0}', space=sflag, size = 0x4, scoped, tag = 'scoped memory for tpu_custom_call.1']
    #allocation7 [shape = 'u8[8192]{0}', space=vmem, size = 0x2000, scoped, tag = 'output window, operand 0']
    %7 = vsyncpa [#allocation3], 0
    %s8 = scalar_lea.sflag [#allocation3], 1
    %9 = vsyncpa %s8, 0
    %10 = vsyncpa [#allocation6], 0
    %11 = vsyncpa [#allocation4], 0
    %s12 = scalar_lea.sflag [#allocation4], 1
    %13 = vsyncpa %s12, 0
    loop: start=0, step=1, limit=4
    $region2: #{tpu_custom_call.1} parent=1 // loop_pre_header
      _
    $region3: #{tpu_custom_call.1} parent=1 // loop_header
      %s15 = sphi 0, %s19
      %p16 = scmp.ge.s32.totalorder %s15, 4
      %s25 = sphi 0, %s27
      %s28 = sphi 0, %s25
      %s29 = sphi 0, %s28
      %s45 = sphi 0, %s29
      %s49 = sphi 0, %s49
      %s51 = sphi 0, %s49
      %s52 = sphi 0, %s51
      %s66 = sphi 0, %s52
      %s72 = sphi 0, %s74
      %s75 = sphi 0, %s72
      %s76 = sphi 0, %s75
      %s92 = sphi 0, %s76
    $region4: #{tpu_custom_call.1} parent=1 // loop_header_branch
      %18 = sbr.rel (%p16) target = $region8
    $region5: #{tpu_custom_call.1} parent=1 // loop_body
      %s20 = ssub.s32 %s15, 1
      %s21 = ssub.s32 %s15, 2
      %s22 = sadd.s32 %s15, 1
      %s23 = ssub.s32 %s15, %s22
      %p24 = scmp.eq.s32.totalorder %s23, 0
      %s26 = sadd.s32 %s25, 1
      %s27 = scalar_select %p24, %s25, %s26
      %p30 = pneg %p24
      %p31 = scmp.eq.s32.totalorder %s15, 1
      %p32 = por %p30, %p31
      %p33 = scmp.ne.s32.totalorder %s25, %s28
      %p34 = scmp.eq.s32.totalorder %s15, 0
      %p35 = por %p33, %p34
      %p36 = scmp.ne.s32.totalorder %s25, %s28
      %p37 = scmp.eq.s32.totalorder %s20, 1
      %p38 = por %p36, %p37
      %p39 = scmp.ne.s32.totalorder %s28, %s29
      %p40 = scmp.eq.s32.totalorder %s20, 0
      %p41 = por %p39, %p40
      %p42 = scmp.ne.s32.totalorder %s28, %s29
      %p43 = scmp.eq.s32.totalorder %s21, 1
      %p44 = por %p42, %p43
      %p46 = scmp.ne.s32.totalorder %s29, %s45
      %p47 = scmp.eq.s32.totalorder %s21, 0
      %p48 = por %p46, %p47
      %s50 = sadd.s32 %s49, 1
      %p53 = scmp.eq.s32.totalorder %s15, 1
      %p54 = scmp.ne.s32.totalorder %s49, %s51
      %p55 = scmp.eq.s32.totalorder %s15, 0
      %p56 = por %p54, %p55
      %p57 = scmp.ne.s32.totalorder %s49, %s51
      %p58 = scmp.eq.s32.totalorder %s20, 1
      %p59 = por %p57, %p58
      %p60 = scmp.ne.s32.totalorder %s51, %s52
      %p61 = scmp.eq.s32.totalorder %s20, 0
      %p62 = por %p60, %p61
      %p63 = scmp.ne.s32.totalorder %s51, %s52
      %p64 = scmp.eq.s32.totalorder %s21, 1
      %p65 = por %p63, %p64
      %p67 = scmp.ne.s32.totalorder %s52, %s66
      %p68 = scmp.eq.s32.totalorder %s21, 0
      %p69 = por %p67, %p68
      %s70 = ssub.s32 %s15, %s22
      %p71 = scmp.eq.s32.totalorder %s70, 0
      %s73 = sadd.s32 %s72, 1
      %s74 = scalar_select %p71, %s72, %s73
      %p77 = pneg %p71
      %p78 = scmp.eq.s32.totalorder %s15, 1
      %p79 = por %p77, %p78
      %p80 = scmp.ne.s32.totalorder %s72, %s75
      %p81 = scmp.eq.s32.totalorder %s15, 0
      %p82 = por %p80, %p81
      %p83 = scmp.ne.s32.totalorder %s72, %s75
      %p84 = scmp.eq.s32.totalorder %s20, 1
      %p85 = por %p83, %p84
      %p86 = scmp.ne.s32.totalorder %s75, %s76
      %p87 = scmp.eq.s32.totalorder %s20, 0
      %p88 = por %p86, %p87
      %p89 = scmp.ne.s32.totalorder %s75, %s76
      %p90 = scmp.eq.s32.totalorder %s21, 1
      %p91 = por %p89, %p90
      %p93 = scmp.ne.s32.totalorder %s76, %s92
      %p94 = scmp.eq.s32.totalorder %s21, 0
      %p95 = por %p93, %p94
      %p96 = scmp.le.s32.totalorder 1, %s15
      %p97 = scmp.lt.s32.totalorder %s15, 3
      %p98 = pnand %p96, %p97
      %p99 = pneg %p98
      // Predicated region
      $region9: #{tpu_custom_call.1} parent=5 // pred_check
        _
      $region10: #{tpu_custom_call.1} parent=5 // pred_check_branch
        %101 = sbr.rel (%p98) target = $region12
      $region11: #{tpu_custom_call.1} parent=5 // pred_region
        %s102 = ssub.s32 %s15, 1
        // Predicated region
        $region13: #{tpu_custom_call.1} parent=11 // pred_check
          %p103 = pneg %p62
        $region14: #{tpu_custom_call.1} parent=11 // pred_check_branch
          %105 = sbr.rel (%p103) target = $region16
        $region15: #{tpu_custom_call.1} parent=11 // pred_region
          %s107 = ssub.s32 128, 128
          %108 = vsyncadd [#allocation6], %s107
          %s110 = sshll.u32 [#allocation5], 4
          %s111 = int_to_ptr.vmem [resolvable:$true] %s110
          %113 = dma.hbm_to_vmem [thread:$0]  %s1, 128, %s111, [#allocation6]
        $region16: #{tpu_custom_call.1} parent=11 // pred_fallthru
          _
      $region12: #{tpu_custom_call.1} parent=5 // pred_fallthru
        _
      %p114 = scmp.lt.s32.totalorder %s15, 2
      // Predicated region
      $region17: #{tpu_custom_call.1} parent=5 // pred_check
        %p115 = pneg %p114
      $region18: #{tpu_custom_call.1} parent=5 // pred_check_branch
        %117 = sbr.rel (%p115) target = $region20
      $region19: #{tpu_custom_call.1} parent=5 // pred_region
        // Predicated region
        $region21: #{tpu_custom_call.1} parent=19 // pred_check
          %p118 = pneg %p35
        $region22: #{tpu_custom_call.1} parent=19 // pred_check_branch
          %120 = sbr.rel (%p118) target = $region24
        $region23: #{tpu_custom_call.1} parent=19 // pred_region
          %s121 = sand.u32 %s25, 1
          %s122 = scalar_lea.sflag [#allocation3], %s121
          %s123 = sand.u32 %s25, 1
          %s124 = smul.addr %s123, 8
          %s125 = scalar_lea.vmem [#allocation2], %s124
          %s127 = ssub.s32 128, 128
          %128 = vsyncadd %s122, %s127
          %s129 = smul.addr %s15, 128
          %s130 = scalar_lea.hbm %s0, %s129
          %s132 = sshll.u32 %s125, 4
          %s133 = int_to_ptr.vmem [resolvable:$true] %s132
          %135 = dma.hbm_to_vmem [thread:$0]  %s130, 128, %s133, %s122
        $region24: #{tpu_custom_call.1} parent=19 // pred_fallthru
          _
      $region20: #{tpu_custom_call.1} parent=5 // pred_fallthru
        _
      %p136 = scmp.le.s32.totalorder 1, %s15
      %p137 = scmp.lt.s32.totalorder %s15, 3
      %p138 = pnand %p136, %p137
      %p139 = pneg %p138
      // Predicated region
      $region25: #{tpu_custom_call.1} parent=5 // pred_check
        _
      $region26: #{tpu_custom_call.1} parent=5 // pred_check_branch
        %141 = sbr.rel (%p138) target = $region28
      $region27: #{tpu_custom_call.1} parent=5 // pred_region
        %s142 = ssub.s32 %s15, 1
        %s143 = sand.u32 %s28, 1
        %s144 = scalar_lea.sflag [#allocation3], %s143
        %s145 = sand.u32 %s28, 1
        %s146 = smul.addr %s145, 8
        %s147 = scalar_lea.vmem [#allocation2], %s146
        // Predicated region
        $region29: #{tpu_custom_call.1} parent=27 // pred_check
          %p148 = pneg %p41
        $region30: #{tpu_custom_call.1} parent=27 // pred_check_branch
          %150 = sbr.rel (%p148) target = $region32
        $region31: #{tpu_custom_call.1} parent=27 // pred_region
          %151 = dma.done %s144, 128
        $region32: #{tpu_custom_call.1} parent=27 // pred_fallthru
          _
        // Predicated region
        $region33: #{tpu_custom_call.1} parent=27 // pred_check
          %p152 = pneg %p62
        $region34: #{tpu_custom_call.1} parent=27 // pred_check_branch
          %154 = sbr.rel (%p152) target = $region36
        $region35: #{tpu_custom_call.1} parent=27 // pred_region
          %155 = dma.done [#allocation6], 128
        $region36: #{tpu_custom_call.1} parent=27 // pred_fallthru
          _
        %s156 = sand.u32 %s28, 1
        %s157 = scalar_lea.sflag [#allocation3], %s156
        %s158 = sand.u32 %s28, 1
        %s159 = smul.addr %s158, 8
        %s160 = scalar_lea.vmem [#allocation2], %s159
        %p161 = pneg %p41
        %p162 = pneg %p38
        %p163 = pneg %p62
        %p164 = pneg %p59
        %p165 = pneg %p88
        %p166 = pneg %p85
        %s167 = sand.u32 %s75, 1
        %s168 = scalar_lea.sflag [#allocation4], %s167
        %s169 = sand.u32 %s75, 1
        %s170 = smul.addr %s169, 8
        %s171 = scalar_lea.vmem [#allocation7], %s170
        %v172 = vld [vmem:[%s147] sm:$0xff]
        %v173 = vld [vmem:[#allocation5] sm:$0xff]
        %v174 = vadd.f32 %v172, %v173
        %175 = vst [vmem:[%s171] sm:$0xff] %v174
        %s176 = sand.u32 %s75, 1
        %s177 = scalar_lea.sflag [#allocation4], %s176
        %s178 = sand.u32 %s75, 1
        %s179 = smul.addr %s178, 8
        %s180 = scalar_lea.vmem [#allocation7], %s179
        // Predicated region
        $region37: #{tpu_custom_call.1} parent=27 // pred_check
          %p181 = pneg %p85
        $region38: #{tpu_custom_call.1} parent=27 // pred_check_branch
          %183 = sbr.rel (%p181) target = $region40
        $region39: #{tpu_custom_call.1} parent=27 // pred_region
          %s185 = ssub.s32 128, 128
          %186 = vsyncadd %s177, %s185
          %s187 = smul.addr %s20, 128
          %s188 = scalar_lea.hbm %s2, %s187
          %s190 = sshll.u32 %s180, 4
          %s191 = int_to_ptr.vmem [resolvable:$true] %s190
          %193 = dma.vmem_to_hbm [thread:$0]  %s191, 128, %s188, %s177
        $region40: #{tpu_custom_call.1} parent=27 // pred_fallthru
          _
      $region28: #{tpu_custom_call.1} parent=5 // pred_fallthru
        _
      %p194 = scmp.le.s32.totalorder 2, %s15
      // Predicated region
      $region41: #{tpu_custom_call.1} parent=5 // pred_check
        %p195 = pneg %p194
      $region42: #{tpu_custom_call.1} parent=5 // pred_check_branch
        %197 = sbr.rel (%p195) target = $region44
      $region43: #{tpu_custom_call.1} parent=5 // pred_region
        %s198 = ssub.s32 %s15, 2
        // Predicated region
        $region45: #{tpu_custom_call.1} parent=43 // pred_check
          %p199 = pneg %p91
        $region46: #{tpu_custom_call.1} parent=43 // pred_check_branch
          %201 = sbr.rel (%p199) target = $region48
        $region47: #{tpu_custom_call.1} parent=43 // pred_region
          %s202 = sand.u32 %s76, 1
          %s203 = scalar_lea.sflag [#allocation4], %s202
          %s204 = sand.u32 %s76, 1
          %s205 = smul.addr %s204, 8
          %s206 = scalar_lea.vmem [#allocation7], %s205
          %207 = dma.done %s203, 128
        $region48: #{tpu_custom_call.1} parent=43 // pred_fallthru
          _
      $region44: #{tpu_custom_call.1} parent=5 // pred_fallthru
        _
    $region6: #{tpu_custom_call.1} parent=1 // loop_footer
      %s19 = sadd.s32 1, %s15
    $region7: #{tpu_custom_call.1} parent=1 // loop_footer_branch
      %14 = sbr.rel target = $region3
    $region8: #{tpu_custom_call.1} parent=1 // loop_exit
      _
    %208 = vsyncpa [#allocation3], 1
    %s209 = scalar_lea.sflag [#allocation3], 1
    %210 = vsyncpa %s209, 1
    %211 = vsyncpa [#allocation6], 1
    %212 = vsyncpa [#allocation4], 1
    %s213 = scalar_lea.sflag [#allocation4], 1
    %214 = vsyncpa %s213, 1

// kernel: tpu_custom_call.1
$region0: #{tpu_custom_call.1}
  #allocation0 [shape = 'u32[]', space=smem, size = 0x4, offset = 0x4, fixed_abs, tag = 'smem constant byte address 0x4 - core index']
  #allocation1 [shape = 'u32[144,128]{1,0:T(1,128)}', space=vmem, size = 0x12000, scoped, tag = 'internal scratch']
  %s0 = inlined_call_operand.hbm [shape: f32[32,256], index: 0, kind: input, shape index: {}]
  %s1 = inlined_call_operand.hbm [shape: f32[1,256], index: 1, kind: input, shape index: {}]
  %s2 = inlined_call_operand.vmem [shape: f32[1,256], index: 2, kind: input, shape index: {}]
  %s3 = inlined_call_operand.hbm [shape: bf16[32,256], index: 3, kind: output, shape index: {}]
  %s4 = sld [smem:[#allocation0]]
  $region30: #{tpu_custom_call.1} parent=0
    _
  %s6 = ssub.s32 1, %s4
  %s7 = scalar_select 0, %s6, %s4
  $region1: #{tpu_custom_call.1} parent=0
    #allocation2 [shape = 'u8[32768]{0}', space=vmem, size = 0x8000, scoped, tag = 'input window, operand 0, single buffered']
    #allocation3 [shape = 's32[1]{0}', space=sflag, size = 0x4, scoped, tag = 'scoped memory for tpu_custom_call.1']
    #allocation4 [shape = 's32[1]{0}', space=sflag, size = 0x4, scoped, tag = 'scoped memory for tpu_custom_call.1']
    #allocation5 [shape = 'u8[1024]{0}', space=vmem, size = 0x400, scoped, tag = 'input window, operand 1, single buffered']
    #allocation6 [shape = 's32[1]{0}', space=sflag, size = 0x4, scoped, tag = 'scoped memory for tpu_custom_call.1']
    #allocation7 [shape = 'u8[16384]{0}', space=vmem, size = 0x4000, scoped, tag = 'output window, operand 0, single buffered']
    %8 = vsyncpa [#allocation3], 0
    %9 = vsyncpa [#allocation6], 0
    %10 = vsyncpa [#allocation4], 0
    // Predicated region
    $region2: #{tpu_custom_call.1} parent=1 // pred_check
      _
    $region3: #{tpu_custom_call.1} parent=1 // pred_check_branch
      %12 = sbr.rel (0) target = $region5
    $region4: #{tpu_custom_call.1} parent=1 // pred_region
      %s14 = ssub.s32 1024, 1024
      %15 = vsyncadd [#allocation3], %s14
      %s16 = sshll.u32 [#allocation2], 4
      %s17 = int_to_ptr.vmem [resolvable:$true] %s16
      %22 = dma.hbm_to_vmem [thread:$0]  %s0, 1024, %s17, [#allocation3], 256, 256, 16
    $region5: #{tpu_custom_call.1} parent=1 // pred_fallthru
      _
    // Predicated region
    $region6: #{tpu_custom_call.1} parent=1 // pred_check
      _
    $region7: #{tpu_custom_call.1} parent=1 // pred_check_branch
      %24 = sbr.rel (0) target = $region9
    $region8: #{tpu_custom_call.1} parent=1 // pred_region
      %s26 = ssub.s32 32, 32
      %27 = vsyncadd [#allocation6], %s26
      %s29 = sshll.u32 [#allocation5], 4
      %s30 = int_to_ptr.vmem [resolvable:$true] %s29
      %32 = dma.hbm_to_vmem [thread:$0]  %s1, 32, %s30, [#allocation6]
    $region9: #{tpu_custom_call.1} parent=1 // pred_fallthru
      _
    // Predicated region
    $region10: #{tpu_custom_call.1} parent=1 // pred_check
      _
    $region11: #{tpu_custom_call.1} parent=1 // pred_check_branch
      %34 = sbr.rel (0) target = $region13
    $region12: #{tpu_custom_call.1} parent=1 // pred_region
      _
    $region13: #{tpu_custom_call.1} parent=1 // pred_fallthru
      _
    // Predicated region
    $region14: #{tpu_custom_call.1} parent=1 // pred_check
      _
    $region15: #{tpu_custom_call.1} parent=1 // pred_check_branch
      %36 = sbr.rel (0) target = $region17
    $region16: #{tpu_custom_call.1} parent=1 // pred_region
      %37 = dma.done [#allocation3], 1024
    $region17: #{tpu_custom_call.1} parent=1 // pred_fallthru
      _
    // Predicated region
    $region18: #{tpu_custom_call.1} parent=1 // pred_check
      _
    $region19: #{tpu_custom_call.1} parent=1 // pred_check_branch
      %39 = sbr.rel (0) target = $region21
    $region20: #{tpu_custom_call.1} parent=1 // pred_region
      %40 = dma.done [#allocation6], 32
    $region21: #{tpu_custom_call.1} parent=1 // pred_fallthru
      _
    %v41 = vld [vmem:[#allocation2] sm:$0xff]
    %v42 = vld [vmem:[#allocation2 + $0x8] sm:$0xff]
    %v43 = vld [vmem:[#allocation2 + $0x10] sm:$0xff]
    %v44 = vld [vmem:[#allocation2 + $0x18] sm:$0xff]
    %v45 = vld [vmem:[#allocation2 + $0x20] sm:$0xff]
    %v46 = vld [vmem:[#allocation2 + $0x28] sm:$0xff]
    %v47 = vld [vmem:[#allocation2 + $0x30] sm:$0xff]
    %v48 = vld [vmem:[#allocation2 + $0x38] sm:$0xff]
    %v49 = vadd.f32 %v41, %v42
    %50 = vadd.xlane.f32.xlu0 %v49
    %v51 = vpop.xlane.xlu0 %50
    %v52 = vadd.f32 %v43, %v44
    %53 = vadd.xlane.f32.xlu0 %v52
    %v54 = vpop.xlane.xlu0 %53
    %v55 = vadd.f32 %v45, %v46
    %56 = vadd.xlane.f32.xlu0 %v55
    %v57 = vpop.xlane.xlu0 %56
    %v58 = vadd.f32 %v47, %v48
    %59 = vadd.xlane.f32.xlu0 %v58
    %v60 = vpop.xlane.xlu0 %59
    %v61 = vrcp.pop 256.0
    %v62 = vmul.f32 %v51, %v61
    %v63 = vmul.f32 %v54, %v61
    %v64 = vmul.f32 %v57, %v61
    %v65 = vmul.f32 %v60, %v61
    %v66 = vsub.f32 %v41, %v62
    %v67 = vsub.f32 %v42, %v62
    %v68 = vsub.f32 %v43, %v63
    %v69 = vsub.f32 %v44, %v63
    %v70 = vsub.f32 %v45, %v64
    %v71 = vsub.f32 %v46, %v64
    %v72 = vsub.f32 %v47, %v65
    %v73 = vsub.f32 %v48, %v65
    %v74 = vmul.f32 %v66, %v66
    %v75 = vmul.f32 %v67, %v67
    %v76 = vmul.f32 %v68, %v68
    %v77 = vmul.f32 %v69, %v69
    %v78 = vmul.f32 %v70, %v70
    %v79 = vmul.f32 %v71, %v71
    %v80 = vmul.f32 %v72, %v72
    %v81 = vmul.f32 %v73, %v73
    %v82 = vadd.f32 %v74, %v75
    %83 = vadd.xlane.f32.xlu0 %v82
    %v84 = vpop.xlane.xlu0 %83
    %v85 = vadd.f32 %v76, %v77
    %86 = vadd.xlane.f32.xlu0 %v85
    %v87 = vpop.xlane.xlu0 %86
    %v88 = vadd.f32 %v78, %v79
    %89 = vadd.xlane.f32.xlu0 %v88
    %v90 = vpop.xlane.xlu0 %89
    %v91 = vadd.f32 %v80, %v81
    %92 = vadd.xlane.f32.xlu0 %v91
    %v93 = vpop.xlane.xlu0 %92
    %v94 = vmul.f32 %v84, %v61
    %v95 = vmul.f32 %v87, %v61
    %v96 = vmul.f32 %v90, %v61
    %v97 = vmul.f32 %v93, %v61
    %v98 = vadd.f32 %v94, 1e-05
    %v99 = vadd.f32 %v95, 1e-05
    %v100 = vadd.f32 %v96, 1e-05
    %v101 = vadd.f32 %v97, 1e-05
    %v102 = vrsqrt.pop %v98
    %v103 = vrsqrt.pop %v99
    %v104 = vrsqrt.pop %v100
    %v105 = vrsqrt.pop %v101
    %v106 = vmul.f32 %v66, %v102
    %v107 = vmul.f32 %v67, %v102
    %v108 = vmul.f32 %v68, %v103
    %v109 = vmul.f32 %v69, %v103
    %v110 = vmul.f32 %v70, %v104
    %v111 = vmul.f32 %v71, %v104
    %v112 = vmul.f32 %v72, %v105
    %v113 = vmul.f32 %v73, %v105
    %v114 = vld [vmem:[#allocation5] sm:$0x3]
    %v116 = vlaneseq
    %v117 = vshrl.u32 %v116, 7
    %v118 = vsub.s32 0, %v117
    %v119 = vrot.slane %v114, %v118
    %v120 = vlaneseq
    %v121 = vshrl.u32 %v120, 7
    %v122 = vsub.s32 1, %v121
    %v123 = vrot.slane %v114, %v122
    %v126 = vmul.f32 %v106, %v119
    %v127 = vmul.f32 %v107, %v123
    %v128 = vmul.f32 %v108, %v119
    %v129 = vmul.f32 %v109, %v123
    %v130 = vmul.f32 %v110, %v119
    %v131 = vmul.f32 %v111, %v123
    %v132 = vmul.f32 %v112, %v119
    %v133 = vmul.f32 %v113, %v123
    %v134 = vld [vmem:[%s2] sm:$0x3]
    %v136 = vlaneseq
    %v137 = vshrl.u32 %v136, 7
    %v138 = vsub.s32 0, %v137
    %v139 = vrot.slane %v134, %v138
    %v140 = vlaneseq
    %v141 = vshrl.u32 %v140, 7
    %v142 = vsub.s32 1, %v141
    %v143 = vrot.slane %v134, %v142
    %v146 = vadd.f32 %v126, %v139
    %v147 = vadd.f32 %v127, %v143
    %v148 = vadd.f32 %v128, %v139
    %v149 = vadd.f32 %v129, %v143
    %v150 = vadd.f32 %v130, %v139
    %v151 = vadd.f32 %v131, %v143
    %v152 = vadd.f32 %v132, %v139
    %v153 = vadd.f32 %v133, %v143
    %v154 = vpack.c.bf16 %v148, %v146
    %v155 = vpack.c.bf16 %v149, %v147
    %v156 = vpack.c.bf16 %v152, %v150
    %v157 = vpack.c.bf16 %v153, %v151
    %v162 = vunpack.c.l.b16 %v154
    %v163 = vunpack.c.l.b16 %v155
    %v164 = vunpack.c.h.b16 %v154
    %v165 = vunpack.c.h.b16 %v155
    %v166 = vunpack.c.l.b16 %v156
    %v167 = vunpack.c.l.b16 %v157
    %v168 = vunpack.c.h.b16 %v156
    %v169 = vunpack.c.h.b16 %v157
    %v170 = vpack.c.b16 %v163, %v162
    %v171 = vpack.c.b16 %v165, %v164
    %v172 = vpack.c.b16 %v167, %v166
    %v173 = vpack.c.b16 %v169, %v168
    %178 = vst [vmem:[#allocation7] sm:$0xff] %v170
    %179 = vst [vmem:[#allocation7 + $0x8] sm:$0xff] %v171
    %180 = vst [vmem:[#allocation7 + $0x10] sm:$0xff] %v172
    %181 = vst [vmem:[#allocation7 + $0x18] sm:$0xff] %v173
    // Predicated region
    $region22: #{tpu_custom_call.1} parent=1 // pred_check
      _
    $region23: #{tpu_custom_call.1} parent=1 // pred_check_branch
      %183 = sbr.rel (0) target = $region25
    $region24: #{tpu_custom_call.1} parent=1 // pred_region
      %s185 = ssub.s32 512, 512
      %186 = vsyncadd [#allocation4], %s185
      %s187 = sshll.u32 [#allocation7], 4
      %s188 = int_to_ptr.vmem [resolvable:$true] %s187
      %193 = dma.vmem_to_hbm [thread:$0]  %s188, 512, %s3, [#allocation4], 128, 128, 8
    $region25: #{tpu_custom_call.1} parent=1 // pred_fallthru
      _
    // Predicated region
    $region26: #{tpu_custom_call.1} parent=1 // pred_check
      _
    $region27: #{tpu_custom_call.1} parent=1 // pred_check_branch
      %195 = sbr.rel (0) target = $region29
    $region28: #{tpu_custom_call.1} parent=1 // pred_region
      %196 = dma.done [#allocation4], 512
    $region29: #{tpu_custom_call.1} parent=1 // pred_fallthru
      _
    %197 = vsyncpa [#allocation3], 1
    %198 = vsyncpa [#allocation6], 1
    %199 = vsyncpa [#allocation4], 1

</llo_original>
